<compile_context>
chip_gen: v5e
topology: v5e:2x2
jax: 0.10.0
libtpu: 0.0.40
codegen_flags: <defaults>
</compile_context>

<pallas_src>
import functools

import jax
import jax.numpy as jnp
from jax.experimental import pallas as pl
from jax.experimental.pallas import tpu as pltpu


def _complex_mul_kernel(x_ref, o_ref, *, cr, ci):
    """Elementwise complex multiply on interleaved (re, im) lane pairs."""
    x = x_ref[...]
    lane = x.shape[-1]            # static block lane width (even, multiple of 128)

    # Pair swap via two static XLU rolls (np.roll semantics: roll(x,s)[k] = x[(k-s)%L]).
    #   up[k] = x[(k+1) % L]  -> imag partner, used on even lanes
    #   dn[k] = x[(k-1) % L]  -> real partner, used on odd lanes
    # Circular-wrap elements land on the wrong parity and are never selected.
    up = pltpu.roll(x, shift=lane - 1, axis=1)
    dn = pltpu.roll(x, shift=1, axis=1)

    # (1, lane) parity predicate; sublane broadcast in the select is free.
    lane_idx = jax.lax.broadcasted_iota(jnp.int32, (1, lane), dimension=1)
    is_even = (lane_idx & 1) == 0

    # even lanes (real): xr*cr - xi*ci ; odd lanes (imag): xi*cr + xr*ci
    # cr / ci are Python floats -> weakly typed immediates, result keeps x.dtype.
    o_ref[...] = x * cr + jnp.where(is_even, up * (-ci), dn * ci)


def _block_byte_cap():
    """Per-block byte budget: 4 live buffers (2x in + 2x out) must fit VMEM."""
    try:
        vmem = getattr(pltpu.get_tpu_info(), "vmem_capacity_bytes", 64 << 20)
    except Exception:  # pragma: no cover - conservative fallback (v7x-sized VMEM)
        vmem = 64 << 20
    # Keep 4 * block well inside physical VMEM (block <= vmem/16), cap at 4 MiB
    # (measured ~86% of HBM roofline already at 4 MiB tiles on v6e).
    return int(min(4 << 20, max(1 << 20, vmem // 16)))


def _pick_block_rows(rows, lane, itemsize):
    """Aligned row tile: <= VMEM cap, and <= ~rows/2 so the grid has >=2 steps."""
    row_align = {4: 8, 2: 16, 1: 32}.get(itemsize, 8)   # native sublane tile
    if rows <= row_align:
        return rows                                      # block == full extent
    cap_rows = max(row_align,
                   (_block_byte_cap() // (lane * itemsize)) // row_align * row_align)
    half = -(-rows // 2)                                 # ceil(rows / 2)
    half_aligned = max(row_align, -(-half // row_align) * row_align)
    return min(cap_rows, half_aligned)                   # always < rows here


def complex_mul(x, complex_const):
    """x: real array of shape (..., 2). Returns view_as_real(view_as_complex(x) * const)."""
    assert x.shape[-1] == 2, "last dim must be 2 (real, imag)"
    cr = float(complex_const.real)
    ci = float(complex_const.imag)

    orig_shape = x.shape
    total = x.size
    itemsize = x.dtype.itemsize

    # Lane width: largest multiple of 128 dividing the element count; otherwise
    # run the 128-aligned prefix through the fast path and a tiny XLA tail.
    lane = None
    for cand in (1024, 512, 256, 128):
        if total % cand == 0:
            lane = cand
            break
    if lane is not None:
        main = total
    else:
        lane = 128
        main = (total // lane) * lane   # lane is even -> (re, im) pairs stay intact

    kernel = functools.partial(_complex_mul_kernel, cr=cr, ci=ci)

    out_main = None
    if main > 0:
        rows = main // lane
        block_rows = _pick_block_rows(rows, lane, itemsize)
        grid = (pl.cdiv(rows, block_rows),)

        if main == total:
            x2 = x.reshape(rows, lane)          # free contiguous reshape
        else:
            x2 = x.reshape(-1)[:main].reshape(rows, lane)

        out_main = pl.pallas_call(
            kernel,
            out_shape=jax.ShapeDtypeStruct((rows, lane), x.dtype),
            grid=grid,
            in_specs=[pl.BlockSpec((block_rows, lane), lambda i: (i, 0))],
            out_specs=pl.BlockSpec((block_rows, lane), lambda i: (i, 0)),
            compiler_params=pltpu.CompilerParams(
                dimension_semantics=("parallel",),
                vmem_limit_bytes=32 * 1024 * 1024,
            ),
        )(x2)

        if main == total:
            return out_main.reshape(orig_shape)

    # Rare path: non-128-aligned tail (< 128 elements) as a plain XLA epilogue.
    # TODO(synk): tail handled outside Pallas (too small for a lane-dense block).
    tail = x.reshape(-1)[main:].reshape(-1, 2)
    re = tail[:, 0] * cr - tail[:, 1] * ci
    im = tail[:, 1] * cr + tail[:, 0] * ci
    out_tail = jnp.stack([re, im], axis=-1).astype(x.dtype).reshape(-1)

    if out_main is None:
        return out_tail.reshape(orig_shape)
    return jnp.concatenate([out_main.reshape(-1), out_tail]).reshape(orig_shape)


def _reference(x, complex_const):
    x_c = jax.lax.complex(x[..., 0].astype(jnp.float32), x[..., 1].astype(jnp.float32))
    ref_c = x_c * jnp.complex64(complex_const)
    return jnp.stack([jnp.real(ref_c), jnp.imag(ref_c)], axis=-1).astype(x.dtype)


if __name__ == "__main__":
    complex_const = complex(2.0, -3.0)

    key = jax.random.PRNGKey(0)
    # Primary test: batch=2, channels=4, seq=16, last dim 2 = (real, imag)
    x = jax.random.normal(key, (2, 4, 16, 2), dtype=jnp.float32)
    out = jax.block_until_ready(complex_mul(x, complex_const))
    assert out.shape == x.shape and out.dtype == x.dtype
    assert jnp.allclose(out, _reference(x, complex_const), atol=1e-5, rtol=1e-5)

    # Row count > sublane tile -> exercises the >=2-step cdiv grid (ragged block).
    k1, k2 = jax.random.split(key)
    y = jax.random.normal(k1, (3, 5, 64, 2), dtype=jnp.float32)   # 1920 elems, rows=15
    out_y = jax.block_until_ready(complex_mul(y, complex_const))
    assert jnp.allclose(out_y, _reference(y, complex_const), atol=1e-5, rtol=1e-5)

    # Non-128-aligned total -> exercises the tiny XLA-epilogue tail path.
    z = jax.random.normal(k2, (3, 5, 2), dtype=jnp.float32)       # 30 elems
    out_z = jax.block_until_ready(complex_mul(z, complex_const))
    assert jnp.allclose(out_z, _reference(z, complex_const), atol=1e-5, rtol=1e-5)

    print("KERNEL_OK")
</pallas_src>

<mosaic_0001>
module attributes {stable_mosaic.version = 11 : i64} {
  func.func @_complex_mul_kernel(%arg0: i32, %arg1: memref<1x256xf32, #tpu.memory_space<vmem>>, %arg2: memref<1x256xf32, #tpu.memory_space<vmem>>) attributes {dimension_semantics = [#tpu.dimension_semantics<parallel>], iteration_bounds = array<i64: 1>, scalar_prefetch = 0 : i64, scratch_operands = 0 : i64, tpu.core_type = #tpu.core_type<tc>, window_params = [{transform_indices = @transform_0, window_bounds = array<i64: 1, 256>}, {transform_indices = @transform_1, window_bounds = array<i64: 1, 256>}]} {
    %c0 = arith.constant 0 : index
    %c0_0 = arith.constant 0 : index
    %0 = vector.load %arg1[%c0, %c0_0] : memref<1x256xf32, #tpu.memory_space<vmem>>, vector<1x256xf32>
    %c255_i32 = arith.constant 255 : i32
    %1 = tpu.dynamic_rotate %0 by %c255_i32 dim 1 : vector<1x256xf32>, i32 -> vector<1x256xf32>
    %c1_i32 = arith.constant 1 : i32
    %2 = tpu.dynamic_rotate %0 by %c1_i32 dim 1 : vector<1x256xf32>, i32 -> vector<1x256xf32>
    %3 = tpu.iota {dimensions = array<i32: 1>} : vector<1x256xi32>
    %c1_i32_1 = arith.constant 1 : i32
    %4 = vector.broadcast %c1_i32_1 : i32 to vector<1x256xi32>
    %5 = arith.andi %3, %4 : vector<1x256xi32>
    %c0_i32 = arith.constant 0 : i32
    %6 = vector.broadcast %c0_i32 : i32 to vector<1x256xi32>
    %7 = arith.cmpi eq, %5, %6 : vector<1x256xi32>
    %cst = arith.constant 2.000000e+00 : f32
    %8 = vector.broadcast %cst : f32 to vector<1x256xf32>
    %9 = arith.mulf %0, %8 : vector<1x256xf32>
    %cst_2 = arith.constant 3.000000e+00 : f32
    %10 = vector.broadcast %cst_2 : f32 to vector<1x256xf32>
    %11 = arith.mulf %1, %10 : vector<1x256xf32>
    %cst_3 = arith.constant -3.000000e+00 : f32
    %12 = vector.broadcast %cst_3 : f32 to vector<1x256xf32>
    %13 = arith.mulf %2, %12 : vector<1x256xf32>
    %14 = arith.select %7, %11, %13 : vector<1x256xi1>, vector<1x256xf32>
    %15 = arith.addf %9, %14 : vector<1x256xf32>
    %c0_4 = arith.constant 0 : index
    %c0_5 = arith.constant 0 : index
    %16 = vector.load %arg2[%c0_4, %c0_5] : memref<1x256xf32, #tpu.memory_space<vmem>>, vector<1x256xf32>
    tpu.vector_store %arg2[%c0_4, %c0_5], %15 {strides = array<i32>} : memref<1x256xf32, #tpu.memory_space<vmem>>, vector<1x256xf32>,
    return
  }
  func.func @transform_0(%arg0: i32) -> (i32, i32) {
    %c0_i32 = arith.constant 0 : i32
    %c0_i32_0 = arith.constant 0 : i32
    return %arg0, %c0_i32 : i32, i32
  }
  func.func @transform_1(%arg0: i32) -> (i32, i32) {
    %c0_i32 = arith.constant 0 : i32
    %c0_i32_0 = arith.constant 0 : i32
    return %arg0, %c0_i32 : i32, i32
  }
}

</mosaic_0001>

<llo_original>
// kernel: tpu_custom_call.1
$region0: #{tpu_custom_call.1}
  #allocation0 [shape = 'u32[]', space=smem, size = 0x4, offset = 0x4, fixed_abs, tag = 'smem constant byte address 0x4 - core index']
  #allocation1 [shape = 'u32[72,128]{1,0:T(1,128)}', space=vmem, size = 0x9000, scoped, tag = 'internal scratch']
  %s0 = inlined_call_operand.hbm [shape: f32[1,256], index: 0, kind: input, shape index: {}]
  %s1 = inlined_call_operand.hbm [shape: f32[1,256], index: 1, kind: output, shape index: {}]
  %s2 = sld [smem:[#allocation0]]
  $region18: #{tpu_custom_call.1} parent=0
    _
  %s4 = ssub.s32 1, %s2
  %s5 = scalar_select 0, %s4, %s2
  $region1: #{tpu_custom_call.1} parent=0
    #allocation2 [shape = 'u8[1024]{0}', space=vmem, size = 0x400, scoped, tag = 'input window, operand 0, single buffered']
    #allocation3 [shape = 's32[1]{0}', space=sflag, size = 0x4, scoped, tag = 'scoped memory for tpu_custom_call.1']
    #allocation4 [shape = 's32[1]{0}', space=sflag, size = 0x4, scoped, tag = 'scoped memory for tpu_custom_call.1']
    #allocation5 [shape = 'u8[1024]{0}', space=vmem, size = 0x400, scoped, tag = 'output window, operand 0, single buffered']
    %6 = vsyncpa [#allocation3], 0
    %7 = vsyncpa [#allocation4], 0
    // Predicated region
    $region2: #{tpu_custom_call.1} parent=1 // pred_check
      _
    $region3: #{tpu_custom_call.1} parent=1 // pred_check_branch
      %9 = sbr.rel (0) target = $region5
    $region4: #{tpu_custom_call.1} parent=1 // pred_region
      %11 = vsyncadd [#allocation3], 0
      %s13 = sshll.u32 %s0, 4
      %s14 = int_to_ptr.hbm [resolvable:$true] %s13
      %s15 = sshll.u32 [#allocation2], 4
      %s16 = int_to_ptr.vmem [resolvable:$true] %s15
      %18 = dma.hbm_to_vmem [thread:$0]  %s14, 32, %s16, [#allocation3]
    $region5: #{tpu_custom_call.1} parent=1 // pred_fallthru
      _
    // Predicated region
    $region6: #{tpu_custom_call.1} parent=1 // pred_check
      _
    $region7: #{tpu_custom_call.1} parent=1 // pred_check_branch
      %20 = sbr.rel (0) target = $region9
    $region8: #{tpu_custom_call.1} parent=1 // pred_region
      %22 = dma.done [#allocation3], 32
    $region9: #{tpu_custom_call.1} parent=1 // pred_fallthru
      _
    %v23 = vld [vmem:[#allocation2] sm:$0x3]
    %v25 = vperm.slane %v23, 0
    %v26 = vperm.slane %v23, 1
    %29 = vrot.lane.b32.xlu0 %v25, 127
    %v30 = vpop.permute.xlu0 %29
    %31 = vrot.lane.b32.xlu0 %v26, 127
    %v32 = vpop.permute.xlu0 %31
    %v33 = vlaneseq
    %v34 = vand.u32 %v33, 127
    %vm35 = vcmp.lt.s32.totalorder %v34, 127
    %v36 = vsel %vm35, %v30, %v32
    %v37 = vsel %vm35, %v32, %v30
    %38 = vrot.lane.b32.xlu0 %v25, 1
    %v39 = vpop.permute.xlu0 %38
    %40 = vrot.lane.b32.xlu0 %v26, 1
    %v41 = vpop.permute.xlu0 %40
    %vm42 = vcmp.lt.s32.totalorder %v34, 1
    %v43 = vsel %vm42, %v39, %v41
    %v44 = vsel %vm42, %v41, %v39
    %v45 = vadd.s32 %v34, 128
    %v46 = vand.u32 %v34, 1
    %v47 = vand.u32 %v45, 1
    %vm48 = vcmp.eq.s32.totalorder %v46, 0
    %vm49 = vcmp.eq.s32.totalorder %v47, 0
    %v50 = vmul.f32 %v23, 2.0
    %v51 = vmul.f32 %v36, 3.0
    %v52 = vmul.f32 %v37, 3.0
    %v53 = vmul.f32 %v44, -3.0
    %v54 = vmul.f32 %v43, -3.0
    %v55 = vsel %vm48, %v51, %v53
    %v56 = vsel %vm49, %v52, %v54
    %v59 = vrot.slane %v56, 7
    %vm60 = vcmask 1040384
    %v61 = vsel %vm60, %v55, %v59
    %v63 = vadd.f32 %v50, %v61
    %v64 = vlaneseq
    %vm65 = vcmp.ge.s32.totalorder %v64, 0
    %vm66 = vcmp.lt.s32.totalorder %v64, 256
    %vm67 = vmand %vm65, %vm66
    %68 = vst.msk [vmem:[#allocation5] sm:$0x3] %vm67, %v63
    // Predicated region
    $region10: #{tpu_custom_call.1} parent=1 // pred_check
      _
    $region11: #{tpu_custom_call.1} parent=1 // pred_check_branch
      %70 = sbr.rel (0) target = $region13
    $region12: #{tpu_custom_call.1} parent=1 // pred_region
      %72 = vsyncadd [#allocation4], 0
      %s74 = sshll.u32 [#allocation5], 4
      %s75 = int_to_ptr.vmem [resolvable:$true] %s74
      %s76 = sshll.u32 %s1, 4
      %s77 = int_to_ptr.hbm [resolvable:$true] %s76
      %79 = dma.vmem_to_hbm [thread:$0]  %s75, 32, %s77, [#allocation4]
    $region13: #{tpu_custom_call.1} parent=1 // pred_fallthru
      _
    // Predicated region
    $region14: #{tpu_custom_call.1} parent=1 // pred_check
      _
    $region15: #{tpu_custom_call.1} parent=1 // pred_check_branch
      %81 = sbr.rel (0) target = $region17
    $region16: #{tpu_custom_call.1} parent=1 // pred_region
      %83 = dma.done [#allocation4], 32
    $region17: #{tpu_custom_call.1} parent=1 // pred_fallthru
      _
    %84 = vsyncpa [#allocation3], 1
    %85 = vsyncpa [#allocation4], 1

</llo_original>
